<compile_context>
chip_gen: v7x
topology: tpu7x:2x2x1
jax: 0.10.0
libtpu: 0.0.40
codegen_flags: <defaults>
</compile_context>

<pallas_src>
import functools

import numpy as np
import jax
import jax.numpy as jnp
from jax import lax
from jax.experimental import pallas as pl
from jax.experimental.pallas import tpu as pltpu


# ----------------------------------------------------------------------------
# Kernel 1: per-view attention score, tiled over nodes.
#   score[i] = (1/N) * sum_rows( tanh(embed_i @ W^T + b) @ att^T )
# grid = (M views, N//tn node-tiles); node-tile axis is the reduction axis.
# ----------------------------------------------------------------------------
def _score_kernel(e_ref, w_ref, b_ref, att_ref, s_ref, acc_ref,
                  *, n_valid, tn, mask_tail):
    i = pl.program_id(0)          # view index
    n = pl.program_id(1)          # node-tile index

    @pl.when(n == 0)
    def _():
        acc_ref[...] = jnp.zeros_like(acc_ref)

    x = e_ref[0]                                                # (tn, D)
    # x @ W^T without a host-side transpose: contract dim 1 of x with dim 1 of W.
    h = lax.dot_general(
        x, w_ref[...],
        dimension_numbers=(((1,), (1,)), ((), ())),
        preferred_element_type=jnp.float32)                     # (tn, D) f32
    h = jnp.tanh(h + b_ref[...].astype(jnp.float32))            # (tn, D) f32
    # Per-row dot with att on the MXU -> (tn, 1); cheap sublane reduce after.
    col = lax.dot_general(
        h, att_ref[...].astype(jnp.float32),
        dimension_numbers=(((1,), (1,)), ((), ())),
        preferred_element_type=jnp.float32)                     # (tn, 1)
    if mask_tail:
        # Mask padded rows of the last (partial) node tile before summing.
        row = n * tn + lax.broadcasted_iota(jnp.int32, col.shape, 0)
        col = jnp.where(row < n_valid, col, 0.0)
    acc_ref[...] += jnp.sum(col, keepdims=True)                 # (1, 1)

    @pl.when(n == pl.num_programs(1) - 1)
    def _():
        s_ref[i] = jnp.sum(acc_ref[...]) * (1.0 / n_valid)      # mean over true N


# ----------------------------------------------------------------------------
# Kernel 2: weighted sum of views, tiled over nodes.
#   z_lo[tile n] = sum_m beta[m] * embeds[m, tile n]
# grid = (N//tn,) node-tiles (fully "parallel"); the M-way sum is a short
# statically-unrolled loop over the (M, tn, D) block; output written once.
# ----------------------------------------------------------------------------
def _wsum_kernel(beta_ref, e_ref, o_ref, *, n_views):
    acc = e_ref[0].astype(jnp.float32) * beta_ref[0]
    for m in range(1, n_views):
        acc = acc + e_ref[m].astype(jnp.float32) * beta_ref[m]
    o_ref[...] = acc.astype(o_ref.dtype)


# Pure-JAX reference (also the small-input fallback path).
def _ref_forward(embeds, W, b, att):
    h = jnp.tanh(jnp.einsum("mnd,kd->mnk", embeds, W) + b)      # (M, N, D)
    sp = h.mean(axis=1)                                         # (M, D)
    scores = jnp.einsum("md,kd->m", sp, att)                    # (M,)
    beta = jax.nn.softmax(scores)
    z = jnp.einsum("m,mnd->nd", beta, embeds)
    return z, beta


def _pick_tile(N, row_bytes, target_bytes=2 << 20, max_tn=2048):
    """Largest node tile (multiple of 8, <= max_tn) with one buffer <= ~2 MiB."""
    tn = min(max_tn, max(8, target_bytes // max(1, row_bytes)))
    tn = int(tn) - int(tn) % 8
    tn = max(8, tn)
    if tn >= N:
        return N          # full-extent block is always a legal block shape
    return tn


def inter_att_forward(embeds, W, b, att, *, tn=None, use_pallas=None):
    """embeds: (M, N, D); W: (D, D) PyTorch layout (out, in); b: (D,); att: (1, D)."""
    M, N, D = embeds.shape
    dtype = embeds.dtype
    itemsize = jnp.dtype(dtype).itemsize

    # At toy sizes the pallas_call / grid-step fixed overhead dominates; let XLA fuse it.
    if use_pallas is None:
        use_pallas = (M * N * D) >= (1 << 16)
    if not use_pallas:
        return _ref_forward(embeds, W, b, att)

    # Tile sizes, per kernel (kernel 2's block carries all M views).
    if tn is None:
        tn1 = _pick_tile(N, D * itemsize)
        tn2 = _pick_tile(N, M * D * itemsize)
    else:
        tn1 = tn2 = tn
    n1_tiles = pl.cdiv(N, tn1)
    n2_tiles = pl.cdiv(N, tn2)

    b2 = b.reshape(1, D)

    # ---- Kernel 1: per-view scores -------------------------------------------------
    scores = pl.pallas_call(
        functools.partial(_score_kernel, n_valid=N, tn=tn1,
                          mask_tail=(N % tn1 != 0)),
        out_shape=jax.ShapeDtypeStruct((M,), jnp.float32),
        grid_spec=pltpu.PrefetchScalarGridSpec(
            num_scalar_prefetch=0,
            grid=(M, n1_tiles),
            in_specs=[
                pl.BlockSpec((1, tn1, D), lambda i, n: (i, n, 0)),  # one node tile of one view
                pl.BlockSpec((D, D), lambda i, n: (0, 0)),          # W, resident
                pl.BlockSpec((1, D), lambda i, n: (0, 0)),          # bias, resident
                pl.BlockSpec((1, D), lambda i, n: (0, 0)),          # att, resident
            ],
            out_specs=pl.BlockSpec(memory_space=pltpu.MemorySpace.SMEM),
            scratch_shapes=[pltpu.VMEM((1, 1), jnp.float32)],       # per-view score accumulator
        ),
        compiler_params=pltpu.CompilerParams(
            dimension_semantics=("arbitrary", "arbitrary")),
    )(embeds, W, b2, att)

    beta = jax.nn.softmax(scores)       # M is tiny; host softmax is negligible

    # ---- Kernel 2: weighted sum of views -------------------------------------------
    z_lo = pl.pallas_call(
        functools.partial(_wsum_kernel, n_views=M),
        out_shape=jax.ShapeDtypeStruct((N, D), dtype),
        grid_spec=pltpu.PrefetchScalarGridSpec(
            num_scalar_prefetch=0,
            grid=(n2_tiles,),
            in_specs=[
                pl.BlockSpec(memory_space=pltpu.MemorySpace.SMEM),  # beta (M,) f32
                pl.BlockSpec((M, tn2, D), lambda n: (0, n, 0)),     # all views, one node tile
            ],
            out_specs=pl.BlockSpec((tn2, D), lambda n: (n, 0)),     # lane-dense, written once
        ),
        compiler_params=pltpu.CompilerParams(
            dimension_semantics=("parallel",)),
    )(beta, embeds)

    return z_lo, beta


if __name__ == "__main__":
    key = jax.random.PRNGKey(0)
    M, N, D = 3, 72, 32          # views, nodes, hidden_dim (small demo shapes)

    k1, k2, k3, k4 = jax.random.split(key, 4)

    # Deterministic parameter init (mimics xavier_normal_ with gain=1.414).
    gain = 1.414
    std_fc = gain * np.sqrt(2.0 / (D + D))
    W = std_fc * jax.random.normal(k1, (D, D), dtype=jnp.float32)       # (out, in)
    b = (1.0 / np.sqrt(D)) * jax.random.normal(k2, (D,), dtype=jnp.float32)
    std_att = gain * np.sqrt(2.0 / (1 + D))
    att = std_att * jax.random.normal(k3, (1, D), dtype=jnp.float32)

    embeds = jax.random.normal(k4, (M, N, D), dtype=jnp.float32)

    z_ref, beta_ref = _ref_forward(embeds, W, b, att)

    # Path 1: auto tile (single full-N tile at this size).
    z1, beta1 = inter_att_forward(embeds, W, b, att, use_pallas=True)
    # Path 2: forced small tile -> multiple node tiles incl. a partial masked tail (72 = 4*16 + 8).
    z2, beta2 = inter_att_forward(embeds, W, b, att, tn=16, use_pallas=True)
    jax.block_until_ready((z1, beta1, z2, beta2))

    for z, beta in ((z1, beta1), (z2, beta2)):
        assert np.allclose(np.asarray(beta), np.asarray(beta_ref), atol=1e-5), "beta mismatch"
        assert np.allclose(np.asarray(z), np.asarray(z_ref), atol=1e-5), "z_lo mismatch"

    print("KERNEL_OK")
</pallas_src>

<mosaic_0001>
module attributes {stable_mosaic.version = 11 : i64} {
  func.func @_score_kernel(%arg0: i32, %arg1: i32, %arg2: memref<1x72x32xf32, #tpu.memory_space<vmem>>, %arg3: memref<32x32xf32, #tpu.memory_space<vmem>>, %arg4: memref<1x32xf32, #tpu.memory_space<vmem>>, %arg5: memref<1x32xf32, #tpu.memory_space<vmem>>, %arg6: memref<3xf32, #tpu.memory_space<smem>>, %arg7: memref<1x1xf32, #tpu.memory_space<vmem>>) attributes {dimension_semantics = [#tpu.dimension_semantics<arbitrary>, #tpu.dimension_semantics<arbitrary>], iteration_bounds = array<i64: 3, 1>, scalar_prefetch = 0 : i64, scratch_operands = 1 : i64, tpu.core_type = #tpu.core_type<tc>, window_params = [{transform_indices = @transform_0, window_bounds = array<i64: 1, 72, 32>}, {pipeline_mode = #tpu.pipeline_mode<synchronous>, transform_indices = @transform_1, window_bounds = array<i64: 32, 32>}, {pipeline_mode = #tpu.pipeline_mode<synchronous>, transform_indices = @transform_2, window_bounds = array<i64: 1, 32>}, {pipeline_mode = #tpu.pipeline_mode<synchronous>, transform_indices = @transform_3, window_bounds = array<i64: 1, 32>}, {transform_indices = @transform_4, window_bounds = array<i64: 3>}]} {
    %c0_i32 = arith.constant 0 : i32
    %0 = arith.cmpi eq, %arg1, %c0_i32 : i32
    %1 = arith.extui %0 : i1 to i32
    %c0_i32_0 = arith.constant 0 : i32
    %2 = arith.cmpi ne, %1, %c0_i32_0 : i32
    scf.if %2 {
      %cst_17 = arith.constant 0.000000e+00 : f32
      %24 = vector.broadcast %cst_17 : f32 to vector<1x1xf32>
      %c0_18 = arith.constant 0 : index
      %c0_19 = arith.constant 0 : index
      %25 = vector.load %arg7[%c0_18, %c0_19] : memref<1x1xf32, #tpu.memory_space<vmem>>, vector<1x1xf32>
      tpu.vector_store %arg7[%c0_18, %c0_19], %24 {strides = array<i32>} : memref<1x1xf32, #tpu.memory_space<vmem>>, vector<1x1xf32>,
    } else {
    }
    %c0 = arith.constant 0 : index
    %c0_1 = arith.constant 0 : index
    %c0_2 = arith.constant 0 : index
    %3 = vector.load %arg2[%c0, %c0_1, %c0_2] : memref<1x72x32xf32, #tpu.memory_space<vmem>>, vector<1x72x32xf32>
    %4 = vector.shape_cast %3 : vector<1x72x32xf32> to vector<72x32xf32>
    %c0_3 = arith.constant 0 : index
    %c0_4 = arith.constant 0 : index
    %5 = vector.load %arg3[%c0_3, %c0_4] : memref<32x32xf32, #tpu.memory_space<vmem>>, vector<32x32xf32>
    %cst = arith.constant dense<0.000000e+00> : vector<72x32xf32>
    %6 = tpu.matmul %4, %5, %cst {dimension_numbers = #tpu.dot_dimension_numbers<[1], [1], [0], [0], [0, 0, 1, 0], [], []>} : vector<72x32xf32>, vector<32x32xf32>, vector<72x32xf32> -> vector<72x32xf32>
    %c0_5 = arith.constant 0 : index
    %c0_6 = arith.constant 0 : index
    %7 = vector.load %arg4[%c0_5, %c0_6] : memref<1x32xf32, #tpu.memory_space<vmem>>, vector<1x32xf32>
    %8 = vector.broadcast %7 : vector<1x32xf32> to vector<72x32xf32>
    %9 = arith.addf %6, %8 : vector<72x32xf32>
    %10 = math.tanh %9 : vector<72x32xf32>
    %c0_7 = arith.constant 0 : index
    %c0_8 = arith.constant 0 : index
    %11 = vector.load %arg5[%c0_7, %c0_8] : memref<1x32xf32, #tpu.memory_space<vmem>>, vector<1x32xf32>
    %cst_9 = arith.constant dense<0.000000e+00> : vector<72x1xf32>
    %12 = tpu.matmul %10, %11, %cst_9 {dimension_numbers = #tpu.dot_dimension_numbers<[1], [1], [0], [0], [0, 0, 1, 0], [], []>} : vector<72x32xf32>, vector<1x32xf32>, vector<72x1xf32> -> vector<72x1xf32>
    %c0_10 = arith.constant 0 : index
    %c0_11 = arith.constant 0 : index
    %13 = vector.load %arg7[%c0_10, %c0_11] : memref<1x1xf32, #tpu.memory_space<vmem>>, vector<1x1xf32>
    %14 = vector.shape_cast %12 : vector<72x1xf32> to vector<1x72x1xf32>
    %cst_12 = arith.constant dense<0.000000e+00> : vector<1xf32>
    %15 = vector.multi_reduction <add>, %14, %cst_12 [1, 2] : vector<1x72x1xf32> to vector<1xf32>
    %16 = vector.shape_cast %15 : vector<1xf32> to vector<1x1x1xf32>
    %17 = vector.extract %16[0, 0, 0] : f32 from vector<1x1x1xf32>
    %18 = vector.broadcast %17 : f32 to vector<1x1xf32>
    %19 = arith.addf %13, %18 : vector<1x1xf32>
    %c0_13 = arith.constant 0 : index
    %c0_14 = arith.constant 0 : index
    %20 = vector.load %arg7[%c0_13, %c0_14] : memref<1x1xf32, #tpu.memory_space<vmem>>, vector<1x1xf32>
    tpu.vector_store %arg7[%c0_13, %c0_14], %19 {strides = array<i32>} : memref<1x1xf32, #tpu.memory_space<vmem>>, vector<1x1xf32>,
    %c0_i32_15 = arith.constant 0 : i32
    %21 = arith.cmpi eq, %arg1, %c0_i32_15 : i32
    %22 = arith.extui %21 : i1 to i32
    %c0_i32_16 = arith.constant 0 : i32
    %23 = arith.cmpi ne, %22, %c0_i32_16 : i32
    scf.if %23 {
      %c0_17 = arith.constant 0 : index
      %c0_18 = arith.constant 0 : index
      %24 = vector.load %arg7[%c0_17, %c0_18] : memref<1x1xf32, #tpu.memory_space<vmem>>, vector<1x1xf32>
      %25 = vector.shape_cast %24 : vector<1x1xf32> to vector<1x1x1xf32>
      %cst_19 = arith.constant dense<0.000000e+00> : vector<1xf32>
      %26 = vector.multi_reduction <add>, %25, %cst_19 [1, 2] : vector<1x1x1xf32> to vector<1xf32>
      %27 = vector.shape_cast %26 : vector<1xf32> to vector<1x1x1xf32>
      %28 = vector.extract %27[0, 0, 0] : f32 from vector<1x1x1xf32>
      %cst_20 = arith.constant 0.013888889 : f32
      %29 = arith.mulf %28, %cst_20 : f32
      %30 = arith.index_cast %arg0 : i32 to index
      %31 = memref.load %arg6[%30] : memref<3xf32, #tpu.memory_space<smem>>
      memref.store %29, %arg6[%30] : memref<3xf32, #tpu.memory_space<smem>>
    } else {
    }
    return
  }
  func.func @transform_0(%arg0: i32, %arg1: i32) -> (i32, i32, i32) {
    %c0_i32 = arith.constant 0 : i32
    %c0_i32_0 = arith.constant 0 : i32
    return %arg0, %arg1, %c0_i32 : i32, i32, i32
  }
  func.func @transform_1(%arg0: i32, %arg1: i32) -> (i32, i32) {
    %c0_i32 = arith.constant 0 : i32
    %c0_i32_0 = arith.constant 0 : i32
    %c0_i32_1 = arith.constant 0 : i32
    return %c0_i32, %c0_i32_0 : i32, i32
  }
  func.func @transform_2(%arg0: i32, %arg1: i32) -> (i32, i32) {
    %c0_i32 = arith.constant 0 : i32
    %c0_i32_0 = arith.constant 0 : i32
    %c0_i32_1 = arith.constant 0 : i32
    return %c0_i32, %c0_i32_0 : i32, i32
  }
  func.func @transform_3(%arg0: i32, %arg1: i32) -> (i32, i32) {
    %c0_i32 = arith.constant 0 : i32
    %c0_i32_0 = arith.constant 0 : i32
    %c0_i32_1 = arith.constant 0 : i32
    return %c0_i32, %c0_i32_0 : i32, i32
  }
  func.func @transform_4(%arg0: i32, %arg1: i32) -> i32 {
    %c0_i32 = arith.constant 0 : i32
    %c0_i32_0 = arith.constant 0 : i32
    return %c0_i32 : i32
  }
}

</mosaic_0001>

<llo_original>
// kernel: tpu_custom_call.1
$region0: #{tpu_custom_call.1}
  #allocation0 [shape = 'u32[]', space=smem, size = 0x4, offset = 0x4, fixed_abs, tag = 'smem constant byte address 0x4 - core index']
  #allocation1 [shape = 'u32[144,128]{1,0:T(1,128)}', space=vmem, size = 0x12000, scoped, tag = 'internal scratch']
  #allocation2 [shape = 'f32[1,1]{1,0:T(1,128)}', space=vmem, size = 0x200, scoped, tag = 'scratch operand']
  %s0 = inlined_call_operand.vmem [shape: f32[3,72,32], index: 0, kind: input, shape index: {}]
  %s1 = inlined_call_operand.vmem [shape: f32[32,32], index: 1, kind: input, shape index: {}]
  %s2 = inlined_call_operand.vmem [shape: f32[1,32], index: 2, kind: input, shape index: {}]
  %s3 = inlined_call_operand.vmem [shape: f32[1,32], index: 3, kind: input, shape index: {}]
  %s4 = inlined_call_operand.hbm [shape: f32[3], index: 4, kind: output, shape index: {}]
  %s5 = sld [smem:[#allocation0]]
  $region57: #{tpu_custom_call.1} parent=0
    _
  %s7 = ssub.s32 1, %s5
  %s8 = scalar_select 0, %s7, %s5
  $region1: #{tpu_custom_call.1} parent=0
    #allocation3 [shape = 'u8[512]{0}', space=smem, size = 0x200, scoped, tag = 'output window, operand 0, single buffered']
    #allocation4 [shape = 's32[2]{0}', space=sflag, size = 0x8, scoped, tag = 'scoped memory for tpu_custom_call.1']
    %9 = vsyncpa [#allocation4], 0
    loop: start=0, step=1, limit=5
    $region2: #{tpu_custom_call.1} parent=1 // loop_pre_header
      _
    $region3: #{tpu_custom_call.1} parent=1 // loop_header
      %s11 = sphi 0, %s15
      %p12 = scmp.ge.s32.totalorder %s11, 5
      %s18 = sphi 0, %s30
      %s19 = sphi 0, %s26
      %s20 = sphi 0, %s18
      %s21 = sphi 0, %s19
      %s22 = sphi 0, %s20
      %s23 = sphi 0, %s21
      %s35 = sphi 0, %s37
      %s38 = sphi 0, %s35
      %s39 = sphi 0, %s38
      %s55 = sphi 0, %s39
      %s59 = sphi 0, %s59
      %s61 = sphi 0, %s59
      %s62 = sphi 0, %s61
      %s76 = sphi 0, %s62
      %s80 = sphi 0, %s80
      %s82 = sphi 0, %s80
      %s83 = sphi 0, %s82
      %s97 = sphi 0, %s83
      %s101 = sphi 0, %s101
      %s103 = sphi 0, %s101
      %s104 = sphi 0, %s103
      %s118 = sphi 0, %s104
      %s122 = sphi 0, %s122
      %s124 = sphi 0, %s122
      %s125 = sphi 0, %s124
      %s139 = sphi 0, %s125
    $region4: #{tpu_custom_call.1} parent=1 // loop_header_branch
      %14 = sbr.rel (%p12) target = $region8
    $region5: #{tpu_custom_call.1} parent=1 // loop_body
      %s16 = ssub.s32 %s11, 1
      %s17 = ssub.s32 %s11, 2
      %s24 = sadd.s32 1, %s19
      %p25 = scmp.ge.s32.totalorder %s24, 1
      %s26 = scalar_select %p25, 0, %s24
      %s27 = sadd.s32 1, %s18
      %s28 = scalar_select %p25, %s27, %s18
      %p29 = scmp.ge.s32.totalorder %s28, 3
      %s30 = scalar_select %p29, 0, %s28
      %s31 = ssub.s32 %s18, %s30
      %s32 = ssub.s32 %s19, %s26
      %s33 = sor.u32 %s31, %s32
      %p34 = scmp.eq.s32.totalorder %s33, 0
      %s36 = sadd.s32 %s35, 1
      %s37 = scalar_select %p34, %s35, %s36
      %p40 = pneg %p34
      %p41 = scmp.eq.s32.totalorder %s11, 2
      %p42 = por %p40, %p41
      %p43 = scmp.ne.s32.totalorder %s35, %s38
      %p44 = scmp.eq.s32.totalorder %s11, 0
      %p45 = por %p43, %p44
      %p46 = scmp.ne.s32.totalorder %s35, %s38
      %p47 = scmp.eq.s32.totalorder %s16, 2
      %p48 = por %p46, %p47
      %p49 = scmp.ne.s32.totalorder %s38, %s39
      %p50 = scmp.eq.s32.totalorder %s16, 0
      %p51 = por %p49, %p50
      %p52 = scmp.ne.s32.totalorder %s38, %s39
      %p53 = scmp.eq.s32.totalorder %s17, 2
      %p54 = por %p52, %p53
      %p56 = scmp.ne.s32.totalorder %s39, %s55
      %p57 = scmp.eq.s32.totalorder %s17, 0
      %p58 = por %p56, %p57
      %s60 = sadd.s32 %s59, 1
      %p63 = scmp.eq.s32.totalorder %s11, 2
      %p64 = scmp.ne.s32.totalorder %s59, %s61
      %p65 = scmp.eq.s32.totalorder %s11, 0
      %p66 = por %p64, %p65
      %p67 = scmp.ne.s32.totalorder %s59, %s61
      %p68 = scmp.eq.s32.totalorder %s16, 2
      %p69 = por %p67, %p68
      %p70 = scmp.ne.s32.totalorder %s61, %s62
      %p71 = scmp.eq.s32.totalorder %s16, 0
      %p72 = por %p70, %p71
      %p73 = scmp.ne.s32.totalorder %s61, %s62
      %p74 = scmp.eq.s32.totalorder %s17, 2
      %p75 = por %p73, %p74
      %p77 = scmp.ne.s32.totalorder %s62, %s76
      %p78 = scmp.eq.s32.totalorder %s17, 0
      %p79 = por %p77, %p78
      %s81 = sadd.s32 %s80, 1
      %p84 = scmp.eq.s32.totalorder %s11, 2
      %p85 = scmp.ne.s32.totalorder %s80, %s82
      %p86 = scmp.eq.s32.totalorder %s11, 0
      %p87 = por %p85, %p86
      %p88 = scmp.ne.s32.totalorder %s80, %s82
      %p89 = scmp.eq.s32.totalorder %s16, 2
      %p90 = por %p88, %p89
      %p91 = scmp.ne.s32.totalorder %s82, %s83
      %p92 = scmp.eq.s32.totalorder %s16, 0
      %p93 = por %p91, %p92
      %p94 = scmp.ne.s32.totalorder %s82, %s83
      %p95 = scmp.eq.s32.totalorder %s17, 2
      %p96 = por %p94, %p95
      %p98 = scmp.ne.s32.totalorder %s83, %s97
      %p99 = scmp.eq.s32.totalorder %s17, 0
      %p100 = por %p98, %p99
      %s102 = sadd.s32 %s101, 1
      %p105 = scmp.eq.s32.totalorder %s11, 2
      %p106 = scmp.ne.s32.totalorder %s101, %s103
      %p107 = scmp.eq.s32.totalorder %s11, 0
      %p108 = por %p106, %p107
      %p109 = scmp.ne.s32.totalorder %s101, %s103
      %p110 = scmp.eq.s32.totalorder %s16, 2
      %p111 = por %p109, %p110
      %p112 = scmp.ne.s32.totalorder %s103, %s104
      %p113 = scmp.eq.s32.totalorder %s16, 0
      %p114 = por %p112, %p113
      %p115 = scmp.ne.s32.totalorder %s103, %s104
      %p116 = scmp.eq.s32.totalorder %s17, 2
      %p117 = por %p115, %p116
      %p119 = scmp.ne.s32.totalorder %s104, %s118
      %p120 = scmp.eq.s32.totalorder %s17, 0
      %p121 = por %p119, %p120
      %s123 = sadd.s32 %s122, 1
      %p126 = scmp.eq.s32.totalorder %s11, 2
      %p127 = scmp.ne.s32.totalorder %s122, %s124
      %p128 = scmp.eq.s32.totalorder %s11, 0
      %p129 = por %p127, %p128
      %p130 = scmp.ne.s32.totalorder %s122, %s124
      %p131 = scmp.eq.s32.totalorder %s16, 2
      %p132 = por %p130, %p131
      %p133 = scmp.ne.s32.totalorder %s124, %s125
      %p134 = scmp.eq.s32.totalorder %s16, 0
      %p135 = por %p133, %p134
      %p136 = scmp.ne.s32.totalorder %s124, %s125
      %p137 = scmp.eq.s32.totalorder %s17, 2
      %p138 = por %p136, %p137
      %p140 = scmp.ne.s32.totalorder %s125, %s139
      %p141 = scmp.eq.s32.totalorder %s17, 0
      %p142 = por %p140, %p141
      %p143 = scmp.le.s32.totalorder 1, %s11
      %p144 = scmp.lt.s32.totalorder %s11, 4
      %p145 = pnand %p143, %p144
      %p146 = pneg %p145
      // Predicated region
      $region9: #{tpu_custom_call.1} parent=5 // pred_check
        _
      $region10: #{tpu_custom_call.1} parent=5 // pred_check_branch
        %148 = sbr.rel (%p145) target = $region12
      $region11: #{tpu_custom_call.1} parent=5 // pred_region
        %s149 = ssub.s32 %s11, 1
        // Predicated region
        $region13: #{tpu_custom_call.1} parent=11 // pred_check
          %p150 = pneg %p72
        $region14: #{tpu_custom_call.1} parent=11 // pred_check_branch
          %152 = sbr.rel (%p150) target = $region16
        $region15: #{tpu_custom_call.1} parent=11 // pred_region
          _
        $region16: #{tpu_custom_call.1} parent=11 // pred_fallthru
          _
        // Predicated region
        $region17: #{tpu_custom_call.1} parent=11 // pred_check
          %p153 = pneg %p93
        $region18: #{tpu_custom_call.1} parent=11 // pred_check_branch
          %155 = sbr.rel (%p153) target = $region20
        $region19: #{tpu_custom_call.1} parent=11 // pred_region
          _
        $region20: #{tpu_custom_call.1} parent=11 // pred_fallthru
          _
        // Predicated region
        $region21: #{tpu_custom_call.1} parent=11 // pred_check
          %p156 = pneg %p114
        $region22: #{tpu_custom_call.1} parent=11 // pred_check_branch
          %158 = sbr.rel (%p156) target = $region24
        $region23: #{tpu_custom_call.1} parent=11 // pred_region
          _
        $region24: #{tpu_custom_call.1} parent=11 // pred_fallthru
          _
      $region12: #{tpu_custom_call.1} parent=5 // pred_fallthru
        _
      %p159 = scmp.lt.s32.totalorder %s11, 3
      // Predicated region
      $region25: #{tpu_custom_call.1} parent=5 // pred_check
        %p160 = pneg %p159
      $region26: #{tpu_custom_call.1} parent=5 // pred_check_branch
        %162 = sbr.rel (%p160) target = $region28
      $region27: #{tpu_custom_call.1} parent=5 // pred_region
        // Predicated region
        $region29: #{tpu_custom_call.1} parent=27 // pred_check
          %p163 = pneg %p45
        $region30: #{tpu_custom_call.1} parent=27 // pred_check_branch
          %165 = sbr.rel (%p163) target = $region32
        $region31: #{tpu_custom_call.1} parent=27 // pred_region
          %s166 = smul.u32 9, %s19
          %p167 = scmp.lt.s32.totalorder %s18, 2
          %s168 = scalar_select %p167, %s18, 2
          %p169 = scmp.lt.s32.totalorder %s166, 8
          %s170 = scalar_select %p169, %s166, 8
          %s171 = smul.addr %s168, 9
          %s172 = sadd.s32 %s170, %s171
          %s173 = smul.addr %s172, 8
          %s174 = scalar_lea.vmem %s0, %s173
          %s175 = smul.u32 9, %s19
        $region32: #{tpu_custom_call.1} parent=27 // pred_fallthru
          _
      $region28: #{tpu_custom_call.1} parent=5 // pred_fallthru
        _
      %p176 = scmp.le.s32.totalorder 1, %s11
      %p177 = scmp.lt.s32.totalorder %s11, 4
      %p178 = pnand %p176, %p177
      %p179 = pneg %p178
      // Predicated region
      $region33: #{tpu_custom_call.1} parent=5 // pred_check
        _
      $region34: #{tpu_custom_call.1} parent=5 // pred_check_branch
        %181 = sbr.rel (%p178) target = $region36
      $region35: #{tpu_custom_call.1} parent=5 // pred_region
        %s182 = ssub.s32 %s11, 1
        %s183 = smul.u32 9, %s21
        %p184 = scmp.lt.s32.totalorder %s20, 2
        %s185 = scalar_select %p184, %s20, 2
        %p186 = scmp.lt.s32.totalorder %s183, 8
        %s187 = scalar_select %p186, %s183, 8
        %s188 = smul.addr %s185, 9
        %s189 = sadd.s32 %s187, %s188
        %s190 = smul.addr %s189, 8
        %s191 = scalar_lea.vmem %s0, %s190
        %p192 = pneg %p51
        %p193 = pneg %p48
        %p194 = pneg %p72
        %p195 = pneg %p69
        %p196 = pneg %p93
        %p197 = pneg %p90
        %p198 = pneg %p114
        %p199 = pneg %p111
        %p200 = pneg %p135
        %p201 = pneg %p132
        %s202 = smul.u32 9, %s21
        %p203 = scmp.lt.s32.totalorder %s20, 2
        %s204 = scalar_select %p203, %s20, 2
        %p205 = scmp.lt.s32.totalorder %s202, 8
        %s206 = scalar_select %p205, %s202, 8
        %s207 = smul.addr %s204, 9
        %s208 = sadd.s32 %s206, %s207
        %s209 = smul.addr %s208, 8
        %s210 = scalar_lea.vmem %s0, %s209
        %s211 = smul.u32 9, %s21
        %p212 = scmp.eq.s32.totalorder %s21, 0
        // Predicated region
        $region37: #{tpu_custom_call.1} parent=35 // pred_check
          %p213 = pneg %p212
        $region38: #{tpu_custom_call.1} parent=35 // pred_check_branch
          %215 = sbr.rel (%p213) target = $region40
        $region39: #{tpu_custom_call.1} parent=35 // pred_region
          %vm216 = vcmask 0
          %217 = vst.msk [vmem:[#allocation2] sm:$0x1] %vm216, 0.0
        $region40: #{tpu_custom_call.1} parent=35 // pred_fallthru
          _
        %v218 = vld [vmem:[%s210] sm:$0xff]
        %v219 = vld [vmem:[%s210 + $0x8] sm:$0xff]
        %v220 = vld [vmem:[%s210 + $0x10] sm:$0xff]
        %v221 = vld [vmem:[%s210 + $0x18] sm:$0xff]
        %v222 = vld [vmem:[%s210 + $0x20] sm:$0xff]
        %v223 = vld [vmem:[%s210 + $0x28] sm:$0xff]
        %v224 = vld [vmem:[%s210 + $0x30] sm:$0xff]
        %v225 = vld [vmem:[%s210 + $0x38] sm:$0xff]
        %v226 = vld [vmem:[%s210 + $0x40] sm:$0xff]
        %v227 = vld [vmem:[%s1] sm:$0xff]
        %v228 = vld [vmem:[%s1 + $0x8] sm:$0xff]
        %v229 = vld [vmem:[%s1 + $0x10] sm:$0xff]
        %v230 = vld [vmem:[%s1 + $0x18] sm:$0xff]
        %v231 = vld [vmem:[%s2] sm:$0x1]
        %v233 = vlaneseq
        %v234 = vshrl.u32 %v233, 7
        %v235 = vsub.s32 0, %v234
        %v236 = vrot.slane %v231, %v235
        %vm238 = vcmask 261120
        %v240 = vsel %vm238, %v218, 0
        %v243 = vsel %vm238, %v219, 0
        %v246 = vsel %vm238, %v220, 0
        %v249 = vsel %vm238, %v221, 0
        %v252 = vsel %vm238, %v222, 0
        %v255 = vsel %vm238, %v223, 0
        %v258 = vsel %vm238, %v224, 0
        %v261 = vsel %vm238, %v225, 0
        %v264 = vsel %vm238, %v226, 0
        %v267 = vsel %vm238, %v227, 0
        %v270 = vsel %vm238, %v228, 0
        %v273 = vsel %vm238, %v229, 0
        %v276 = vsel %vm238, %v230, 0
        %278 = vmatprep.subr.mxu0 0.0
        %279 = vmatpush1.xpose.msra.mxu0 %v267
        %280 = vmatprep.subr.mxu0 0.0
        %281 = vmatpush1.xpose.msra.mxu0 %v270
        %282 = vmatprep.subr.mxu0 0.0
        %283 = vmatpush1.xpose.msra.mxu0 %v273
        %284 = vmatprep.subr.mxu0 0.0
        %285 = vmatpush1.xpose.msra.mxu0 %v276
        %286 = vmatprep.subr.mxu0 0.0
        %287 = vmatpush1.xpose.msra.mxu0 0.0
        %288 = vmatprep.subr.mxu0 0.0
        %289 = vmatpush1.xpose.msra.mxu0 0.0
        %290 = vmatprep.subr.mxu0 0.0
        %291 = vmatpush1.xpose.msra.mxu0 0.0
        %292 = vmatprep.subr.mxu0 0.0
        %293 = vmatpush1.xpose.msra.mxu0 0.0
        %294 = vmatprep.subr.mxu0 0.0
        %295 = vmatpush1.xpose.msra.mxu0 0.0
        %296 = vmatprep.subr.mxu0 0.0
        %297 = vmatpush1.xpose.msra.mxu0 0.0
        %298 = vmatprep.subr.mxu0 0.0
        %299 = vmatpush1.xpose.msra.mxu0 0.0
        %300 = vmatprep.subr.mxu0 0.0
        %301 = vmatpush1.xpose.msra.mxu0 0.0
        %302 = vmatprep.subr.mxu0 0.0
        %303 = vmatpush1.xpose.msra.mxu0 0.0
        %304 = vmatprep.subr.mxu0 0.0
        %305 = vmatpush1.xpose.msra.mxu0 0.0
        %306 = vmatprep.subr.mxu0 0.0
        %307 = vmatpush1.xpose.msra.mxu0 0.0
        %308 = vmatprep.subr.mxu0 0.0
        %309 = vmatpush1.xpose.msra.mxu0 0.0
        %310 = vmatprep.subr.mxu0 0.0
        %311 = vmatpush1.xpose.msra.mxu0 0.0
        %312 = vmatprep.subr.mxu0 0.0
        %313 = vmatpush1.xpose.msra.mxu0 0.0
        %314 = vmatprep.subr.mxu0 0.0
        %315 = vmatpush1.xpose.msra.mxu0 0.0
        %316 = vmatprep.subr.mxu0 0.0
        %317 = vmatpush1.xpose.msra.mxu0 0.0
        %318 = vmatprep.subr.mxu0 0.0
        %319 = vmatpush1.xpose.msra.mxu0 0.0
        %320 = vmatprep.subr.mxu0 0.0
        %321 = vmatpush1.xpose.msra.mxu0 0.0
        %322 = vmatprep.subr.mxu0 0.0
        %323 = vmatpush1.xpose.msra.mxu0 0.0
        %324 = vmatprep.subr.mxu0 0.0
        %325 = vmatpush1.xpose.msra.mxu0 0.0
        %326 = vmatprep.subr.mxu0 0.0
        %327 = vmatpush1.xpose.msra.mxu0 0.0
        %328 = vmatprep.subr.mxu0 0.0
        %329 = vmatpush1.xpose.msra.mxu0 0.0
        %330 = vmatprep.subr.mxu0 0.0
        %331 = vmatpush1.xpose.msra.mxu0 0.0
        %332 = vmatprep.subr.mxu0 0.0
        %333 = vmatpush1.xpose.msra.mxu0 0.0
        %334 = vmatprep.subr.mxu0 0.0
        %335 = vmatpush1.xpose.msra.mxu0 0.0
        %336 = vmatprep.subr.mxu0 0.0
        %337 = vmatpush1.xpose.msra.mxu0 0.0
        %338 = vmatprep.subr.mxu0 0.0
        %339 = vmatpush1.xpose.msra.mxu0 0.0
        %340 = vmatprep.subr.mxu0 0.0
        %341 = vmatpush1.xpose.msra.mxu0 0.0
        %342 = vmatprep.mubr.f32.mxu0 0.0
        %343 = vmatmul.mubr.f32.gmra.mrb[0].mxu0 %v240
        %v344 = vpop.f32.mrb[0].mxu0
        %v345 = vadd.f32 %v236, %v344
        %v346 = vpop.f32.mrb[0].mxu0
        %347 = vmatprep.mubr.f32.mxu0 0.0
        %348 = vmatmul.mubr.f32.gmra.mrb[0].mxu0 %v243
        %v349 = vpop.f32.mrb[0].mxu0
        %v350 = vadd.f32 %v236, %v349
        %v351 = vpop.f32.mrb[0].mxu0
        %352 = vmatprep.mubr.f32.mxu0 0.0
        %353 = vmatmul.mubr.f32.gmra.mrb[0].mxu0 %v246
        %v354 = vpop.f32.mrb[0].mxu0
        %v355 = vadd.f32 %v236, %v354
        %v356 = vpop.f32.mrb[0].mxu0
        %357 = vmatprep.mubr.f32.mxu0 0.0
        %358 = vmatmul.mubr.f32.gmra.mrb[0].mxu0 %v249
        %v359 = vpop.f32.mrb[0].mxu0
        %v360 = vadd.f32 %v236, %v359
        %v361 = vpop.f32.mrb[0].mxu0
        %362 = vmatprep.mubr.f32.mxu0 0.0
        %363 = vmatmul.mubr.f32.gmra.mrb[0].mxu0 %v252
        %v364 = vpop.f32.mrb[0].mxu0
        %v365 = vadd.f32 %v236, %v364
        %v366 = vpop.f32.mrb[0].mxu0
        %367 = vmatprep.mubr.f32.mxu0 0.0
        %368 = vmatmul.mubr.f32.gmra.mrb[0].mxu0 %v255
        %v369 = vpop.f32.mrb[0].mxu0
        %v370 = vadd.f32 %v236, %v369
        %v371 = vpop.f32.mrb[0].mxu0
        %372 = vmatprep.mubr.f32.mxu0 0.0
        %373 = vmatmul.mubr.f32.gmra.mrb[0].mxu0 %v258
        %v374 = vpop.f32.mrb[0].mxu0
        %v375 = vadd.f32 %v236, %v374
        %v376 = vpop.f32.mrb[0].mxu0
        %377 = vmatprep.mubr.f32.mxu0 0.0
        %378 = vmatmul.mubr.f32.gmra.mrb[0].mxu0 %v261
        %v379 = vpop.f32.mrb[0].mxu0
        %v380 = vadd.f32 %v236, %v379
        %v381 = vpop.f32.mrb[0].mxu0
        %382 = vmatprep.mubr.f32.mxu0 0.0
        %383 = vmatmul.mubr.f32.gmra.mrb[0].mxu0 %v264
        %v384 = vpop.f32.mrb[0].mxu0
        %v385 = vadd.f32 %v236, %v384
        %v386 = vpop.f32.mrb[0].mxu0
        %387 = vdwg.mxu0
        %v388 = vtanh.pop %v345
        %v389 = vtanh.pop %v350
        %v390 = vtanh.pop %v355
        %v391 = vtanh.pop %v360
        %v392 = vtanh.pop %v365
        %v393 = vtanh.pop %v370
        %v394 = vtanh.pop %v375
        %v395 = vtanh.pop %v380
        %v396 = vtanh.pop %v385
        %v397 = vld [vmem:[%s3] sm:$0x1]
        %v399 = vlaneseq
        %v400 = vshrl.u32 %v399, 7
        %v401 = vsub.s32 0, %v400
        %v402 = vrot.slane %v397, %v401
        %v404 = vmul.f32 %v388, %v402
        %v405 = vmul.f32 %v389, %v402
        %v406 = vmul.f32 %v390, %v402
        %v407 = vmul.f32 %v391, %v402
        %v408 = vmul.f32 %v392, %v402
        %v409 = vmul.f32 %v393, %v402
        %v410 = vmul.f32 %v394, %v402
        %v411 = vmul.f32 %v395, %v402
        %v412 = vmul.f32 %v396, %v402
        %v413 = vsel %vm238, %v404, 0.0
        %414 = vadd.xlane.f32.xlu0 %v413
        %v415 = vpop.xlane.xlu0 %414
        %v416 = vsel %vm238, %v405, 0.0
        %417 = vadd.xlane.f32.xlu0 %v416
        %v418 = vpop.xlane.xlu0 %417
        %v419 = vsel %vm238, %v406, 0.0
        %420 = vadd.xlane.f32.xlu0 %v419
        %v421 = vpop.xlane.xlu0 %420
        %v422 = vsel %vm238, %v407, 0.0
        %423 = vadd.xlane.f32.xlu0 %v422
        %v424 = vpop.xlane.xlu0 %423
        %v425 = vsel %vm238, %v408, 0.0
        %426 = vadd.xlane.f32.xlu0 %v425
        %v427 = vpop.xlane.xlu0 %426
        %v428 = vsel %vm238, %v409, 0.0
        %429 = vadd.xlane.f32.xlu0 %v428
        %v430 = vpop.xlane.xlu0 %429
        %v431 = vsel %vm238, %v410, 0.0
        %432 = vadd.xlane.f32.xlu0 %v431
        %v433 = vpop.xlane.xlu0 %432
        %v434 = vsel %vm238, %v411, 0.0
        %435 = vadd.xlane.f32.xlu0 %v434
        %v436 = vpop.xlane.xlu0 %435
        %v437 = vsel %vm238, %v412, 0.0
        %438 = vadd.xlane.f32.xlu0 %v437
        %v439 = vpop.xlane.xlu0 %438
        %v440 = vld [vmem:[#allocation2] sm:$0x1]
        %vm441 = vcmask 7168
        %v442 = vsel %vm441, %v415, 0.0
        %v443 = vsel %vm441, %v418, 0.0
        %v444 = vadd.f32 %v442, %v443
        %v445 = vsel %vm441, %v421, 0.0
        %v446 = vadd.f32 %v444, %v445
        %v447 = vsel %vm441, %v424, 0.0
        %v448 = vadd.f32 %v446, %v447
        %v449 = vsel %vm441, %v427, 0.0
        %v450 = vadd.f32 %v448, %v449
        %v451 = vsel %vm441, %v430, 0.0
        %v452 = vadd.f32 %v450, %v451
        %v453 = vsel %vm441, %v433, 0.0
        %v454 = vadd.f32 %v452, %v453
        %v455 = vsel %vm441, %v436, 0.0
        %v456 = vadd.f32 %v454, %v455
        %v457 = vsel %vm441, %v439, 0.0
        %v458 = vadd.f32 %v456, %v457
        %459 = vadd.xlane.f32.xlu0 %v458
        %v460 = vpop.xlane.xlu0 %459
        %v461 = vrot.slane %v460, 4
        %v462 = vadd.f32 %v460, %v461
        %v463 = vrot.slane %v462, 2
        %v464 = vadd.f32 %v462, %v463
        %v465 = vrot.slane %v464, 1
        %v466 = vadd.f32 %v464, %v465
        %s467 = vtos %v466
        %v468 = vstv %s467
        %v469 = vadd.f32 %v440, %v468
        %vm470 = vcmask 0
        %471 = vst.msk [vmem:[#allocation2] sm:$0x1] %vm470, %v469
        // Predicated region
        $region41: #{tpu_custom_call.1} parent=35 // pred_check
          %p472 = pneg %p212
        $region42: #{tpu_custom_call.1} parent=35 // pred_check_branch
          %474 = sbr.rel (%p472) target = $region44
        $region43: #{tpu_custom_call.1} parent=35 // pred_region
          %v475 = vld [vmem:[#allocation2] sm:$0x1]
          %v476 = vadd.f32 %v475, 0.0
          %s477 = vtos %v476
          %s478 = smul.f32 %s477, 0.013888889
          %s479 = scalar_lea.smem [#allocation3], %s20
          %480 = sst [smem:[%s479]] %s478
        $region44: #{tpu_custom_call.1} parent=35 // pred_fallthru
          _
        // Predicated region
        $region45: #{tpu_custom_call.1} parent=35 // pred_check
          %p481 = pneg %p132
        $region46: #{tpu_custom_call.1} parent=35 // pred_check_branch
          %483 = sbr.rel (%p481) target = $region48
        $region47: #{tpu_custom_call.1} parent=35 // pred_region
          %s485 = ssub.s32 16, 16
          %486 = vsyncadd [#allocation4], %s485
          %489 = dma.smem_to_hbm [#allocation3], 16, %s4, [#allocation4]
        $region48: #{tpu_custom_call.1} parent=35 // pred_fallthru
          _
        // Predicated region
        $region49: #{tpu_custom_call.1} parent=35 // pred_check
          %p490 = pneg %p132
        $region50: #{tpu_custom_call.1} parent=35 // pred_check_branch
          %492 = sbr.rel (%p490) target = $region52
        $region51: #{tpu_custom_call.1} parent=35 // pred_region
          %493 = dma.done [#allocation4], 16
        $region52: #{tpu_custom_call.1} parent=35 // pred_fallthru
          _
        %494 = sfence
      $region36: #{tpu_custom_call.1} parent=5 // pred_fallthru
        _
      %p495 = scmp.le.s32.totalorder 2, %s11
      // Predicated region
      $region53: #{tpu_custom_call.1} parent=5 // pred_check
        %p496 = pneg %p495
      $region54: #{tpu_custom_call.1} parent=5 // pred_check_branch
        %498 = sbr.rel (%p496) target = $region56
      $region55: #{tpu_custom_call.1} parent=5 // pred_region
        %s499 = ssub.s32 %s11, 2
      $region56: #{tpu_custom_call.1} parent=5 // pred_fallthru
        _
    $region6: #{tpu_custom_call.1} parent=1 // loop_footer
      %s15 = sadd.s32 1, %s11
    $region7: #{tpu_custom_call.1} parent=1 // loop_footer_branch
      %10 = sbr.rel target = $region3
    $region8: #{tpu_custom_call.1} parent=1 // loop_exit
      _
    %500 = vsyncpa [#allocation4], 1
    %s501 = scalar_lea.sflag [#allocation4], 1
    %502 = vsyncpa %s501, 1

</llo_original>
